<compile_context>
chip_gen: v7x
topology: tpu7x:2x2x1
jax: 0.10.0
libtpu: 0.0.40
codegen_flags: <defaults>
</compile_context>

<pallas_src>
import functools

import jax
import jax.numpy as jnp
from jax import lax
from jax.experimental import pallas as pl
from jax.experimental.pallas import tpu as pltpu


# Large finite negative for masked_fill(-inf): exp underflows to exactly 0 for
# partially-masked rows (bit-identical softmax), and fully-masked rows become
# a finite uniform row instead of NaN.
_MASK_FILL = -1e30


def _sdpa_body(q_ref, k_ref, v_ref, kmask_ref, qmask_ref, *, inv_temperature):
    q = q_ref[...]            # (bt, tq, D)   native dtype -> MXU directly
    k = k_ref[...]            # (bt, Lk, D)
    v = v_ref[...]            # (bt, Lk, Dv)
    kmask = kmask_ref[...]    # (bt, 1|tq, Lk) int8, nonzero == masked
    qmask = qmask_ref[...]    # (bt, tq, 1|Lk) int8, nonzero == masked

    # scores = q @ k^T : batched dot_general contracting the last (D) dims.
    # No transpose of k is materialized; f32 accumulation on the MXU.
    scores = lax.dot_general(
        q, k,
        dimension_numbers=(((2,), (2,)), ((0,), (0,))),
        preferred_element_type=jnp.float32,
    ) * inv_temperature                                  # (bt, tq, Lk) f32

    # masked_fill(key_mask, -inf)  (broadcasts if kmask is rank-reduced)
    scores = jnp.where(kmask != 0, _MASK_FILL, scores)

    # softmax over the key axis; normalization via the EUP approx reciprocal.
    m = jnp.max(scores, axis=-1, keepdims=True)
    e = jnp.exp(scores - m)
    s = jnp.sum(e, axis=-1, keepdims=True)
    attn = e * pl.reciprocal(s, approx=True)

    # masked_fill(query_mask, 0)  (broadcasts if qmask is rank-reduced)
    attn = jnp.where(qmask != 0, 0.0, attn)

    # TODO(synk): nn.Dropout(attn_dropout) is identity in eval mode; not applied.

    # out = attn @ v, attn cast down to v's dtype before feeding the MXU.
    out = lax.dot_general(
        attn.astype(v_ref.dtype), v,
        dimension_numbers=(((2,), (1,)), ((0,), (0,))),
        preferred_element_type=jnp.float32,
    )                                                    # (bt, tq, Dv) f32
    return out, attn


def _sdpa_kernel_attn(q_ref, k_ref, v_ref, km_ref, qm_ref, out_ref, attn_ref,
                      *, inv_temperature):
    out, attn = _sdpa_body(q_ref, k_ref, v_ref, km_ref, qm_ref,
                           inv_temperature=inv_temperature)
    out_ref[...] = out.astype(out_ref.dtype)
    attn_ref[...] = attn.astype(attn_ref.dtype)


def _sdpa_kernel_noattn(q_ref, k_ref, v_ref, km_ref, qm_ref, out_ref,
                        *, inv_temperature):
    out, _ = _sdpa_body(q_ref, k_ref, v_ref, km_ref, qm_ref,
                        inv_temperature=inv_temperature)
    out_ref[...] = out.astype(out_ref.dtype)


def _pick_tile(n, cap, multiple=1):
    """Largest divisor of n that is <= cap and a multiple of `multiple`;
    falls back to n (a single full-extent block) if none exists."""
    if n <= cap:
        return n
    for t in range(cap, 0, -1):
        if n % t == 0 and t % multiple == 0:
            return t
    return n


def scaled_dot_product_attention(q, k, v, key_mask, query_mask, temperature,
                                 *, return_attn=True):
    """q:(B,Lq,D)  k:(B,Lk,D)  v:(B,Lk,Dv).
    key_mask: (B,Lk) or (B,Lq,Lk) bool.  query_mask: (B,Lq) or (B,Lq,Lk) bool."""
    B, Lq, D = q.shape
    _, Lk, _ = k.shape
    Dv = v.shape[-1]

    # Masks -> int8; rank-reduced masks stay rank-reduced (kernel broadcasts).
    if key_mask.ndim == 2:                       # (B, Lk) per-key padding
        kmask = key_mask.reshape(B, 1, Lk).astype(jnp.int8)
    else:                                        # (B, Lq, Lk)
        kmask = key_mask.astype(jnp.int8)
    if query_mask.ndim == 2:                     # (B, Lq) per-query padding
        qmask = query_mask.reshape(B, Lq, 1).astype(jnp.int8)
    else:                                        # (B, Lq, Lk)
        qmask = query_mask.astype(jnp.int8)

    # Tiling: batch and query axes are independent ("parallel"); the key axis
    # stays whole per block (attn must be returned fully normalized).
    tq = _pick_tile(Lq, 256, 8)   # query-tile: <=256 rows keeps v7x VMEM happy
    bt = _pick_tile(B, 8, 1)      # batch-block: amortizes per-grid-step cost
    grid = (B // bt, Lq // tq)

    km_lq = kmask.shape[1]        # 1 (rank-reduced) or Lq
    qm_lk = qmask.shape[2]        # 1 (rank-reduced) or Lk

    in_specs = [
        pl.BlockSpec((bt, tq, D), lambda b, i: (b, i, 0)),
        pl.BlockSpec((bt, Lk, D), lambda b, i: (b, 0, 0)),
        pl.BlockSpec((bt, Lk, Dv), lambda b, i: (b, 0, 0)),
        pl.BlockSpec((bt, 1 if km_lq == 1 else tq, Lk),
                     (lambda b, i: (b, 0, 0)) if km_lq == 1
                     else (lambda b, i: (b, i, 0))),
        pl.BlockSpec((bt, tq, qm_lk), lambda b, i: (b, i, 0)),
    ]
    out_spec_out = pl.BlockSpec((bt, tq, Dv), lambda b, i: (b, i, 0))
    out_spec_attn = pl.BlockSpec((bt, tq, Lk), lambda b, i: (b, i, 0))

    compiler_params = pltpu.CompilerParams(
        dimension_semantics=("parallel", "parallel"),
        # Comfortably under v7x's 64 MiB physical VMEM; plenty on v5e/v6e.
        vmem_limit_bytes=48 * 1024 * 1024,
    )
    inv_temperature = 1.0 / float(temperature)

    if return_attn:
        kernel = functools.partial(_sdpa_kernel_attn,
                                   inv_temperature=inv_temperature)
        out, attn = pl.pallas_call(
            kernel,
            out_shape=(
                jax.ShapeDtypeStruct((B, Lq, Dv), q.dtype),
                jax.ShapeDtypeStruct((B, Lq, Lk), q.dtype),
            ),
            grid_spec=pltpu.PrefetchScalarGridSpec(
                num_scalar_prefetch=0,
                grid=grid,
                in_specs=in_specs,
                out_specs=[out_spec_out, out_spec_attn],
            ),
            compiler_params=compiler_params,
        )(q, k, v, kmask, qmask)
        return out, attn

    kernel = functools.partial(_sdpa_kernel_noattn,
                               inv_temperature=inv_temperature)
    out = pl.pallas_call(
        kernel,
        out_shape=jax.ShapeDtypeStruct((B, Lq, Dv), q.dtype),
        grid_spec=pltpu.PrefetchScalarGridSpec(
            num_scalar_prefetch=0,
            grid=grid,
            in_specs=in_specs,
            out_specs=out_spec_out,
        ),
        compiler_params=compiler_params,
    )(q, k, v, kmask, qmask)
    return out


def _reference(q, k, v, key_mask, query_mask, temperature):
    km = key_mask if key_mask.ndim == 3 else key_mask[:, None, :]
    qm = query_mask if query_mask.ndim == 3 else query_mask[:, :, None]
    attn = jnp.einsum("bqd,bkd->bqk", q, k) / temperature
    attn = jnp.where(km, -jnp.inf, attn)
    attn = jax.nn.softmax(attn, axis=2)
    attn = jnp.where(qm, 0.0, attn)
    out = jnp.einsum("bqk,bkd->bqd", attn, v)
    return out, attn


if __name__ == "__main__":
    key = jax.random.PRNGKey(0)
    B, Lq, Lk, D, Dv = 2, 8, 8, 32, 32
    temperature = float(D) ** 0.5

    k1, k2, k3 = jax.random.split(key, 3)
    q = jax.random.normal(k1, (B, Lq, D), dtype=jnp.float32)
    kk = jax.random.normal(k2, (B, Lk, D), dtype=jnp.float32)
    v = jax.random.normal(k3, (B, Lk, Dv), dtype=jnp.float32)

    # Rank-reduced masks (preferred interface): per-key / per-query padding.
    key_mask_2d = jnp.zeros((B, Lk), dtype=bool).at[1, Lk - 2:].set(True)
    query_mask_2d = jnp.zeros((B, Lq), dtype=bool).at[0, Lq - 1].set(True)

    out, attn = scaled_dot_product_attention(
        q, kk, v, key_mask_2d, query_mask_2d, temperature)
    jax.block_until_ready((out, attn))

    out_ref, attn_ref = _reference(q, kk, v, key_mask_2d, query_mask_2d,
                                   temperature)
    # Tolerance slightly loose: softmax normalization uses the EUP
    # approximate reciprocal.
    assert jnp.allclose(out, out_ref, atol=5e-3, rtol=5e-3), "output mismatch"
    assert jnp.allclose(attn, attn_ref, atol=5e-3, rtol=5e-3), "attn mismatch"

    # Full-rank (B, Lq, Lk) masks (torch.masked_fill-style) also supported.
    key_mask_3d = jnp.broadcast_to(key_mask_2d[:, None, :], (B, Lq, Lk))
    query_mask_3d = jnp.broadcast_to(query_mask_2d[:, :, None], (B, Lq, Lk))
    out3, attn3 = scaled_dot_product_attention(
        q, kk, v, key_mask_3d, query_mask_3d, temperature)
    jax.block_until_ready((out3, attn3))
    assert jnp.allclose(out3, out_ref, atol=5e-3, rtol=5e-3), "output mismatch (3d masks)"
    assert jnp.allclose(attn3, attn_ref, atol=5e-3, rtol=5e-3), "attn mismatch (3d masks)"

    # Output-only path: skips the O(Lq*Lk) attention writeback entirely.
    out_only = scaled_dot_product_attention(
        q, kk, v, key_mask_2d, query_mask_2d, temperature, return_attn=False)
    jax.block_until_ready(out_only)
    assert jnp.allclose(out_only, out_ref, atol=5e-3, rtol=5e-3), "output mismatch (no attn)"

    print("KERNEL_OK")
</pallas_src>

<mosaic_0001>
module attributes {stable_mosaic.version = 11 : i64} {
  func.func @_sdpa_kernel_attn(%arg0: i32, %arg1: i32, %arg2: memref<2x8x32xf32, #tpu.memory_space<vmem>>, %arg3: memref<2x8x32xf32, #tpu.memory_space<vmem>>, %arg4: memref<2x8x32xf32, #tpu.memory_space<vmem>>, %arg5: memref<2x1x8xi8, #tpu.memory_space<vmem>>, %arg6: memref<2x8x1xi8, #tpu.memory_space<vmem>>, %arg7: memref<2x8x32xf32, #tpu.memory_space<vmem>>, %arg8: memref<2x8x8xf32, #tpu.memory_space<vmem>>) attributes {dimension_semantics = [#tpu.dimension_semantics<parallel>, #tpu.dimension_semantics<parallel>], iteration_bounds = array<i64: 1, 1>, scalar_prefetch = 0 : i64, scratch_operands = 0 : i64, tpu.core_type = #tpu.core_type<tc>, window_params = [{transform_indices = @transform_0, window_bounds = array<i64: 2, 8, 32>}, {transform_indices = @transform_1, window_bounds = array<i64: 2, 8, 32>}, {transform_indices = @transform_2, window_bounds = array<i64: 2, 8, 32>}, {transform_indices = @transform_3, window_bounds = array<i64: 2, 1, 8>}, {transform_indices = @transform_4, window_bounds = array<i64: 2, 8, 1>}, {transform_indices = @transform_5, window_bounds = array<i64: 2, 8, 32>}, {transform_indices = @transform_6, window_bounds = array<i64: 2, 8, 8>}]} {
    %c0 = arith.constant 0 : index
    %c0_0 = arith.constant 0 : index
    %c0_1 = arith.constant 0 : index
    %0 = vector.load %arg2[%c0, %c0_0, %c0_1] : memref<2x8x32xf32, #tpu.memory_space<vmem>>, vector<2x8x32xf32>
    %c0_2 = arith.constant 0 : index
    %c0_3 = arith.constant 0 : index
    %c0_4 = arith.constant 0 : index
    %1 = vector.load %arg3[%c0_2, %c0_3, %c0_4] : memref<2x8x32xf32, #tpu.memory_space<vmem>>, vector<2x8x32xf32>
    %c0_5 = arith.constant 0 : index
    %c0_6 = arith.constant 0 : index
    %c0_7 = arith.constant 0 : index
    %2 = vector.load %arg4[%c0_5, %c0_6, %c0_7] : memref<2x8x32xf32, #tpu.memory_space<vmem>>, vector<2x8x32xf32>
    %c0_8 = arith.constant 0 : index
    %c0_9 = arith.constant 0 : index
    %c0_10 = arith.constant 0 : index
    %3 = vector.load %arg5[%c0_8, %c0_9, %c0_10] : memref<2x1x8xi8, #tpu.memory_space<vmem>>, vector<2x1x8xi8>
    %c0_11 = arith.constant 0 : index
    %c0_12 = arith.constant 0 : index
    %c0_13 = arith.constant 0 : index
    %4 = vector.load %arg6[%c0_11, %c0_12, %c0_13] : memref<2x8x1xi8, #tpu.memory_space<vmem>>, vector<2x8x1xi8>
    %cst = arith.constant dense<0.000000e+00> : vector<2x8x8xf32>
    %5 = tpu.matmul %0, %1, %cst {dimension_numbers = #tpu.dot_dimension_numbers<[2], [2], [1], [1], [0, 0, 0, 1, 1, 1], [0], [0]>} : vector<2x8x32xf32>, vector<2x8x32xf32>, vector<2x8x8xf32> -> vector<2x8x8xf32>
    %cst_14 = arith.constant 0.176776692 : f32
    %6 = vector.broadcast %cst_14 : f32 to vector<2x8x8xf32>
    %7 = arith.mulf %5, %6 : vector<2x8x8xf32>
    %c0_i8 = arith.constant 0 : i8
    %8 = vector.broadcast %c0_i8 : i8 to vector<2x1x8xi8>
    %9 = arith.cmpi ne, %3, %8 : vector<2x1x8xi8>
    %cst_15 = arith.constant -1.000000e+30 : f32
    %10 = vector.shape_cast %9 : vector<2x1x8xi1> to vector<2x1x8xi1>
    %11 = vector.broadcast %10 : vector<2x1x8xi1> to vector<2x8x8xi1>
    %12 = vector.broadcast %cst_15 : f32 to vector<2x8x8xf32>
    %13 = arith.select %11, %12, %7 : vector<2x8x8xi1>, vector<2x8x8xf32>
    %cst_16 = arith.constant dense<0xFF800000> : vector<2x8xf32>
    %14 = vector.multi_reduction <maximumf>, %13, %cst_16 [2] : vector<2x8x8xf32> to vector<2x8xf32>
    %15 = vector.shape_cast %14 : vector<2x8xf32> to vector<2x8x1xf32>
    %16 = vector.broadcast %15 : vector<2x8x1xf32> to vector<2x8x8xf32>
    %17 = arith.subf %13, %16 : vector<2x8x8xf32>
    %18 = math.exp %17 : vector<2x8x8xf32>
    %cst_17 = arith.constant dense<0.000000e+00> : vector<2x8xf32>
    %19 = vector.multi_reduction <add>, %18, %cst_17 [2] : vector<2x8x8xf32> to vector<2x8xf32>
    %20 = vector.shape_cast %19 : vector<2x8xf32> to vector<2x8x1xf32>
    %21 = tpu.reciprocal %20 {approx = true} : vector<2x8x1xf32> -> vector<2x8x1xf32>
    %22 = vector.broadcast %21 : vector<2x8x1xf32> to vector<2x8x8xf32>
    %23 = arith.mulf %18, %22 : vector<2x8x8xf32>
    %c0_i8_18 = arith.constant 0 : i8
    %24 = vector.broadcast %c0_i8_18 : i8 to vector<2x8x1xi8>
    %25 = arith.cmpi ne, %4, %24 : vector<2x8x1xi8>
    %cst_19 = arith.constant 0.000000e+00 : f32
    %26 = vector.shape_cast %25 : vector<2x8x1xi1> to vector<2x8x1xi1>
    %27 = vector.broadcast %26 : vector<2x8x1xi1> to vector<2x8x8xi1>
    %28 = vector.broadcast %cst_19 : f32 to vector<2x8x8xf32>
    %29 = arith.select %27, %28, %23 : vector<2x8x8xi1>, vector<2x8x8xf32>
    %cst_20 = arith.constant dense<0.000000e+00> : vector<2x8x32xf32>
    %30 = tpu.matmul %29, %2, %cst_20 {dimension_numbers = #tpu.dot_dimension_numbers<[2], [1], [1], [2], [0, 0, 0, 1, 1, 2], [0], [0]>} : vector<2x8x8xf32>, vector<2x8x32xf32>, vector<2x8x32xf32> -> vector<2x8x32xf32>
    %c0_21 = arith.constant 0 : index
    %c0_22 = arith.constant 0 : index
    %c0_23 = arith.constant 0 : index
    %31 = vector.load %arg7[%c0_21, %c0_22, %c0_23] : memref<2x8x32xf32, #tpu.memory_space<vmem>>, vector<2x8x32xf32>
    tpu.vector_store %arg7[%c0_21, %c0_22, %c0_23], %30 {strides = array<i32>} : memref<2x8x32xf32, #tpu.memory_space<vmem>>, vector<2x8x32xf32>,
    %c0_24 = arith.constant 0 : index
    %c0_25 = arith.constant 0 : index
    %c0_26 = arith.constant 0 : index
    %32 = vector.load %arg8[%c0_24, %c0_25, %c0_26] : memref<2x8x8xf32, #tpu.memory_space<vmem>>, vector<2x8x8xf32>
    tpu.vector_store %arg8[%c0_24, %c0_25, %c0_26], %29 {strides = array<i32>} : memref<2x8x8xf32, #tpu.memory_space<vmem>>, vector<2x8x8xf32>,
    return
  }
  func.func @transform_0(%arg0: i32, %arg1: i32) -> (i32, i32, i32) {
    %c0_i32 = arith.constant 0 : i32
    %c0_i32_0 = arith.constant 0 : i32
    return %arg0, %arg1, %c0_i32 : i32, i32, i32
  }
  func.func @transform_1(%arg0: i32, %arg1: i32) -> (i32, i32, i32) {
    %c0_i32 = arith.constant 0 : i32
    %c0_i32_0 = arith.constant 0 : i32
    %c0_i32_1 = arith.constant 0 : i32
    return %arg0, %c0_i32, %c0_i32_0 : i32, i32, i32
  }
  func.func @transform_2(%arg0: i32, %arg1: i32) -> (i32, i32, i32) {
    %c0_i32 = arith.constant 0 : i32
    %c0_i32_0 = arith.constant 0 : i32
    %c0_i32_1 = arith.constant 0 : i32
    return %arg0, %c0_i32, %c0_i32_0 : i32, i32, i32
  }
  func.func @transform_3(%arg0: i32, %arg1: i32) -> (i32, i32, i32) {
    %c0_i32 = arith.constant 0 : i32
    %c0_i32_0 = arith.constant 0 : i32
    %c0_i32_1 = arith.constant 0 : i32
    return %arg0, %c0_i32, %c0_i32_0 : i32, i32, i32
  }
  func.func @transform_4(%arg0: i32, %arg1: i32) -> (i32, i32, i32) {
    %c0_i32 = arith.constant 0 : i32
    %c0_i32_0 = arith.constant 0 : i32
    return %arg0, %arg1, %c0_i32 : i32, i32, i32
  }
  func.func @transform_5(%arg0: i32, %arg1: i32) -> (i32, i32, i32) {
    %c0_i32 = arith.constant 0 : i32
    %c0_i32_0 = arith.constant 0 : i32
    return %arg0, %arg1, %c0_i32 : i32, i32, i32
  }
  func.func @transform_6(%arg0: i32, %arg1: i32) -> (i32, i32, i32) {
    %c0_i32 = arith.constant 0 : i32
    %c0_i32_0 = arith.constant 0 : i32
    return %arg0, %arg1, %c0_i32 : i32, i32, i32
  }
}

</mosaic_0001>

<llo_original>
// kernel: tpu_custom_call.1
$region0: #{tpu_custom_call.1}
  #allocation0 [shape = 'u32[]', space=smem, size = 0x4, offset = 0x4, fixed_abs, tag = 'smem constant byte address 0x4 - core index']
  #allocation1 [shape = 'u32[144,128]{1,0:T(1,128)}', space=vmem, size = 0x12000, scoped, tag = 'internal scratch']
  %s0 = inlined_call_operand.hbm [shape: f32[2,8,32], index: 0, kind: input, shape index: {}]
  %s1 = inlined_call_operand.hbm [shape: f32[2,8,32], index: 1, kind: input, shape index: {}]
  %s2 = inlined_call_operand.vmem [shape: f32[2,8,32], index: 2, kind: input, shape index: {}]
  %s3 = inlined_call_operand.vmem [shape: s8[2,1,8], index: 3, kind: input, shape index: {}]
  %s4 = inlined_call_operand.vmem [shape: s8[2,8,1], index: 4, kind: input, shape index: {}]
  %s5 = inlined_call_operand.hbm [shape: f32[2,8,32], index: 5, kind: output, shape index: {0}]
  %s6 = inlined_call_operand.hbm [shape: f32[2,8,8], index: 6, kind: output, shape index: {1}]
  %7 = xla_tuple %s5, %s6
  %s8 = sld [smem:[#allocation0]]
  $region46: #{tpu_custom_call.1} parent=0
    _
  %s10 = ssub.s32 1, %s8
  %s11 = scalar_select 0, %s10, %s8
  $region1: #{tpu_custom_call.1} parent=0
    #allocation2 [shape = 'u8[8192]{0}', space=vmem, size = 0x2000, scoped, tag = 'input window, operand 0, single buffered']
    #allocation3 [shape = 's32[1]{0}', space=sflag, size = 0x4, scoped, tag = 'scoped memory for tpu_custom_call.1']
    #allocation4 [shape = 's32[1]{0}', space=sflag, size = 0x4, scoped, tag = 'scoped memory for tpu_custom_call.1']
    #allocation5 [shape = 'u8[8192]{0}', space=vmem, size = 0x2000, scoped, tag = 'input window, operand 1, single buffered']
    #allocation6 [shape = 's32[1]{0}', space=sflag, size = 0x4, scoped, tag = 'scoped memory for tpu_custom_call.1']
    #allocation7 [shape = 'u8[8192]{0}', space=vmem, size = 0x2000, scoped, tag = 'output window, operand 0, single buffered']
    #allocation8 [shape = 'u8[8192]{0}', space=vmem, size = 0x2000, scoped, tag = 'output window, operand 1, single buffered']
    #allocation9 [shape = 's32[1]{0}', space=sflag, size = 0x4, scoped, tag = 'scoped memory for tpu_custom_call.1']
    %12 = vsyncpa [#allocation3], 0
    %13 = vsyncpa [#allocation6], 0
    %14 = vsyncpa [#allocation4], 0
    %15 = vsyncpa [#allocation9], 0
    // Predicated region
    $region2: #{tpu_custom_call.1} parent=1 // pred_check
      _
    $region3: #{tpu_custom_call.1} parent=1 // pred_check_branch
      %17 = sbr.rel (0) target = $region5
    $region4: #{tpu_custom_call.1} parent=1 // pred_region
      %s19 = ssub.s32 256, 256
      %20 = vsyncadd [#allocation3], %s19
      %s21 = sshll.u32 [#allocation2], 4
      %s22 = int_to_ptr.vmem [resolvable:$true] %s21
      %27 = dma.hbm_to_vmem [thread:$0]  %s0, 256, %s22, [#allocation3], 128, 128, 8
    $region5: #{tpu_custom_call.1} parent=1 // pred_fallthru
      _
    // Predicated region
    $region6: #{tpu_custom_call.1} parent=1 // pred_check
      _
    $region7: #{tpu_custom_call.1} parent=1 // pred_check_branch
      %29 = sbr.rel (0) target = $region9
    $region8: #{tpu_custom_call.1} parent=1 // pred_region
      %s31 = ssub.s32 256, 256
      %32 = vsyncadd [#allocation6], %s31
      %s33 = sshll.u32 [#allocation5], 4
      %s34 = int_to_ptr.vmem [resolvable:$true] %s33
      %39 = dma.hbm_to_vmem [thread:$0]  %s1, 256, %s34, [#allocation6], 128, 128, 8
    $region9: #{tpu_custom_call.1} parent=1 // pred_fallthru
      _
    // Predicated region
    $region10: #{tpu_custom_call.1} parent=1 // pred_check
      _
    $region11: #{tpu_custom_call.1} parent=1 // pred_check_branch
      %41 = sbr.rel (0) target = $region13
    $region12: #{tpu_custom_call.1} parent=1 // pred_region
      _
    $region13: #{tpu_custom_call.1} parent=1 // pred_fallthru
      _
    // Predicated region
    $region14: #{tpu_custom_call.1} parent=1 // pred_check
      _
    $region15: #{tpu_custom_call.1} parent=1 // pred_check_branch
      %43 = sbr.rel (0) target = $region17
    $region16: #{tpu_custom_call.1} parent=1 // pred_region
      _
    $region17: #{tpu_custom_call.1} parent=1 // pred_fallthru
      _
    // Predicated region
    $region18: #{tpu_custom_call.1} parent=1 // pred_check
      _
    $region19: #{tpu_custom_call.1} parent=1 // pred_check_branch
      %45 = sbr.rel (0) target = $region21
    $region20: #{tpu_custom_call.1} parent=1 // pred_region
      _
    $region21: #{tpu_custom_call.1} parent=1 // pred_fallthru
      _
    // Predicated region
    $region22: #{tpu_custom_call.1} parent=1 // pred_check
      _
    $region23: #{tpu_custom_call.1} parent=1 // pred_check_branch
      %47 = sbr.rel (0) target = $region25
    $region24: #{tpu_custom_call.1} parent=1 // pred_region
      %48 = dma.done [#allocation3], 256
    $region25: #{tpu_custom_call.1} parent=1 // pred_fallthru
      _
    // Predicated region
    $region26: #{tpu_custom_call.1} parent=1 // pred_check
      _
    $region27: #{tpu_custom_call.1} parent=1 // pred_check_branch
      %50 = sbr.rel (0) target = $region29
    $region28: #{tpu_custom_call.1} parent=1 // pred_region
      %51 = dma.done [#allocation6], 256
    $region29: #{tpu_custom_call.1} parent=1 // pred_fallthru
      _
    %v54 = vld [vmem:[#allocation2] sm:$0xff]
    %v55 = vld [vmem:[#allocation2 + $0x8] sm:$0xff]
    %v56 = vld [vmem:[#allocation5] sm:$0xff]
    %v57 = vld [vmem:[#allocation5 + $0x8] sm:$0xff]
    %v58 = vld [vmem:[%s2] sm:$0xff]
    %v59 = vld [vmem:[%s2 + $0x8] sm:$0xff]
    %v60 = vld [vmem:[%s3] sm:$0x1]
    %v61 = vld [vmem:[%s3 + $0x1] sm:$0x1]
    %v62 = vld [vmem:[%s4] sm:$0x3]
    %v63 = vld [vmem:[%s4 + $0x2] sm:$0x3]
    %vm64 = vcmask 261120
    %v66 = vsel %vm64, %v54, 0
    %v69 = vsel %vm64, %v56, 0
    %71 = vmatprep.subr.mxu0 0.0
    %72 = vmatpush1.xpose.msra.mxu0 %v69
    %73 = vmatprep.subr.mxu0 0.0
    %74 = vmatpush1.xpose.msra.mxu0 0.0
    %75 = vmatprep.subr.mxu0 0.0
    %76 = vmatpush1.xpose.msra.mxu0 0.0
    %77 = vmatprep.subr.mxu0 0.0
    %78 = vmatpush1.xpose.msra.mxu0 0.0
    %79 = vmatprep.subr.mxu0 0.0
    %80 = vmatpush1.xpose.msra.mxu0 0.0
    %81 = vmatprep.subr.mxu0 0.0
    %82 = vmatpush1.xpose.msra.mxu0 0.0
    %83 = vmatprep.subr.mxu0 0.0
    %84 = vmatpush1.xpose.msra.mxu0 0.0
    %85 = vmatprep.subr.mxu0 0.0
    %86 = vmatpush1.xpose.msra.mxu0 0.0
    %87 = vmatprep.subr.mxu0 0.0
    %88 = vmatpush1.xpose.msra.mxu0 0.0
    %89 = vmatprep.subr.mxu0 0.0
    %90 = vmatpush1.xpose.msra.mxu0 0.0
    %91 = vmatprep.subr.mxu0 0.0
    %92 = vmatpush1.xpose.msra.mxu0 0.0
    %93 = vmatprep.subr.mxu0 0.0
    %94 = vmatpush1.xpose.msra.mxu0 0.0
    %95 = vmatprep.subr.mxu0 0.0
    %96 = vmatpush1.xpose.msra.mxu0 0.0
    %97 = vmatprep.subr.mxu0 0.0
    %98 = vmatpush1.xpose.msra.mxu0 0.0
    %99 = vmatprep.subr.mxu0 0.0
    %100 = vmatpush1.xpose.msra.mxu0 0.0
    %101 = vmatprep.subr.mxu0 0.0
    %102 = vmatpush1.xpose.msra.mxu0 0.0
    %103 = vmatprep.subr.mxu0 0.0
    %104 = vmatpush1.xpose.msra.mxu0 0.0
    %105 = vmatprep.subr.mxu0 0.0
    %106 = vmatpush1.xpose.msra.mxu0 0.0
    %107 = vmatprep.subr.mxu0 0.0
    %108 = vmatpush1.xpose.msra.mxu0 0.0
    %109 = vmatprep.subr.mxu0 0.0
    %110 = vmatpush1.xpose.msra.mxu0 0.0
    %111 = vmatprep.subr.mxu0 0.0
    %112 = vmatpush1.xpose.msra.mxu0 0.0
    %113 = vmatprep.subr.mxu0 0.0
    %114 = vmatpush1.xpose.msra.mxu0 0.0
    %115 = vmatprep.subr.mxu0 0.0
    %116 = vmatpush1.xpose.msra.mxu0 0.0
    %117 = vmatprep.subr.mxu0 0.0
    %118 = vmatpush1.xpose.msra.mxu0 0.0
    %119 = vmatprep.subr.mxu0 0.0
    %120 = vmatpush1.xpose.msra.mxu0 0.0
    %121 = vmatprep.subr.mxu0 0.0
    %122 = vmatpush1.xpose.msra.mxu0 0.0
    %123 = vmatprep.subr.mxu0 0.0
    %124 = vmatpush1.xpose.msra.mxu0 0.0
    %125 = vmatprep.subr.mxu0 0.0
    %126 = vmatpush1.xpose.msra.mxu0 0.0
    %127 = vmatprep.subr.mxu0 0.0
    %128 = vmatpush1.xpose.msra.mxu0 0.0
    %129 = vmatprep.subr.mxu0 0.0
    %130 = vmatpush1.xpose.msra.mxu0 0.0
    %131 = vmatprep.subr.mxu0 0.0
    %132 = vmatpush1.xpose.msra.mxu0 0.0
    %133 = vmatprep.subr.mxu0 0.0
    %134 = vmatpush1.xpose.msra.mxu0 0.0
    %135 = vmatprep.mubr.f32.mxu0 0.0
    %136 = vmatmul.mubr.f32.gmra.mrb[0].mxu0 %v66
    %v137 = vpop.f32.mrb[0].mxu0
    %v138 = vadd.f32 0.0, %v137
    %v139 = vpop.f32.mrb[0].mxu0
    %140 = vdwg.mxu0
    %v142 = vsel %vm64, %v55, 0
    %v145 = vsel %vm64, %v57, 0
    %147 = vmatprep.subr.mxu0 0.0
    %148 = vmatpush1.xpose.msra.mxu0 %v145
    %149 = vmatprep.subr.mxu0 0.0
    %150 = vmatpush1.xpose.msra.mxu0 0.0
    %151 = vmatprep.subr.mxu0 0.0
    %152 = vmatpush1.xpose.msra.mxu0 0.0
    %153 = vmatprep.subr.mxu0 0.0
    %154 = vmatpush1.xpose.msra.mxu0 0.0
    %155 = vmatprep.subr.mxu0 0.0
    %156 = vmatpush1.xpose.msra.mxu0 0.0
    %157 = vmatprep.subr.mxu0 0.0
    %158 = vmatpush1.xpose.msra.mxu0 0.0
    %159 = vmatprep.subr.mxu0 0.0
    %160 = vmatpush1.xpose.msra.mxu0 0.0
    %161 = vmatprep.subr.mxu0 0.0
    %162 = vmatpush1.xpose.msra.mxu0 0.0
    %163 = vmatprep.subr.mxu0 0.0
    %164 = vmatpush1.xpose.msra.mxu0 0.0
    %165 = vmatprep.subr.mxu0 0.0
    %166 = vmatpush1.xpose.msra.mxu0 0.0
    %167 = vmatprep.subr.mxu0 0.0
    %168 = vmatpush1.xpose.msra.mxu0 0.0
    %169 = vmatprep.subr.mxu0 0.0
    %170 = vmatpush1.xpose.msra.mxu0 0.0
    %171 = vmatprep.subr.mxu0 0.0
    %172 = vmatpush1.xpose.msra.mxu0 0.0
    %173 = vmatprep.subr.mxu0 0.0
    %174 = vmatpush1.xpose.msra.mxu0 0.0
    %175 = vmatprep.subr.mxu0 0.0
    %176 = vmatpush1.xpose.msra.mxu0 0.0
    %177 = vmatprep.subr.mxu0 0.0
    %178 = vmatpush1.xpose.msra.mxu0 0.0
    %179 = vmatprep.subr.mxu0 0.0
    %180 = vmatpush1.xpose.msra.mxu0 0.0
    %181 = vmatprep.subr.mxu0 0.0
    %182 = vmatpush1.xpose.msra.mxu0 0.0
    %183 = vmatprep.subr.mxu0 0.0
    %184 = vmatpush1.xpose.msra.mxu0 0.0
    %185 = vmatprep.subr.mxu0 0.0
    %186 = vmatpush1.xpose.msra.mxu0 0.0
    %187 = vmatprep.subr.mxu0 0.0
    %188 = vmatpush1.xpose.msra.mxu0 0.0
    %189 = vmatprep.subr.mxu0 0.0
    %190 = vmatpush1.xpose.msra.mxu0 0.0
    %191 = vmatprep.subr.mxu0 0.0
    %192 = vmatpush1.xpose.msra.mxu0 0.0
    %193 = vmatprep.subr.mxu0 0.0
    %194 = vmatpush1.xpose.msra.mxu0 0.0
    %195 = vmatprep.subr.mxu0 0.0
    %196 = vmatpush1.xpose.msra.mxu0 0.0
    %197 = vmatprep.subr.mxu0 0.0
    %198 = vmatpush1.xpose.msra.mxu0 0.0
    %199 = vmatprep.subr.mxu0 0.0
    %200 = vmatpush1.xpose.msra.mxu0 0.0
    %201 = vmatprep.subr.mxu0 0.0
    %202 = vmatpush1.xpose.msra.mxu0 0.0
    %203 = vmatprep.subr.mxu0 0.0
    %204 = vmatpush1.xpose.msra.mxu0 0.0
    %205 = vmatprep.subr.mxu0 0.0
    %206 = vmatpush1.xpose.msra.mxu0 0.0
    %207 = vmatprep.subr.mxu0 0.0
    %208 = vmatpush1.xpose.msra.mxu0 0.0
    %209 = vmatprep.subr.mxu0 0.0
    %210 = vmatpush1.xpose.msra.mxu0 0.0
    %211 = vmatprep.mubr.f32.mxu0 0.0
    %212 = vmatmul.mubr.f32.gmra.mrb[0].mxu0 %v142
    %v213 = vpop.f32.mrb[0].mxu0
    %v214 = vadd.f32 0.0, %v213
    %v215 = vpop.f32.mrb[0].mxu0
    %216 = vdwg.mxu0
    %v217 = vmul.f32 %v138, 0.17677669
    %v218 = vmul.f32 %v214, 0.17677669
    %vm219 = vnez %v60
    %vm220 = vnez %v61
    %v221 = vsel %vm219, 16843009, 0
    %v222 = vsel %vm220, 16843009, 0
    %v223 = vunpack.c.0.s8 %v221
    %v224 = vunpack.c.0.s8 %v222
    %vm225 = vcmp.ne.s32.totalorder %v223, 0
    %vm226 = vcmp.ne.s32.totalorder %v224, 0
    %v227 = vsel %vm225, 1, 0
    %v228 = vsel %vm226, 1, 0
    %v229 = vlaneseq
    %v230 = vshrl.u32 %v229, 7
    %v231 = vsub.s32 0, %v230
    %v232 = vrot.slane %v227, %v231
    %v233 = vlaneseq
    %v234 = vshrl.u32 %v233, 7
    %v235 = vsub.s32 0, %v234
    %v236 = vrot.slane %v228, %v235
    %vm237 = vcmp.eq.s32.totalorder %v232, 1
    %vm238 = vcmp.eq.s32.totalorder %v236, 1
    %v239 = vsel %vm237, -1e+30, %v217
    %v240 = vsel %vm238, -1e+30, %v218
    %vm241 = vcmask 64512
    %v242 = vsel %vm241, %v239, -inf
    %243 = vmax.xlane.f32.xlu0 %v242
    %v244 = vpop.xlane.xlu0 %243
    %v245 = vsel %vm241, %v240, -inf
    %246 = vmax.xlane.f32.xlu0 %v245
    %v247 = vpop.xlane.xlu0 %246
    %v248 = vsub.f32 %v239, %v244
    %v249 = vsub.f32 %v240, %v247
    %v250 = vmul.f32 %v248, 1.442695
    %v251 = vpow.pop %v250
    %v252 = vmul.f32 %v249, 1.442695
    %v253 = vpow.pop %v252
    %v254 = vsel %vm241, %v251, 0.0
    %255 = vadd.xlane.f32.xlu0 %v254
    %v256 = vpop.xlane.xlu0 %255
    %v257 = vsel %vm241, %v253, 0.0
    %258 = vadd.xlane.f32.xlu0 %v257
    %v259 = vpop.xlane.xlu0 %258
    %v260 = vrcp.pop %v256
    %v261 = vrcp.pop %v259
    %v262 = vmul.f32 %v251, %v260
    %v263 = vmul.f32 %v253, %v261
    %vm264 = vnez %v62
    %vm265 = vnez %v63
    %v266 = vsel %vm264, 16843009, 0
    %v267 = vsel %vm265, 16843009, 0
    %v268 = vunpack.c.0.s8 %v266
    %v269 = vunpack.c.0.s8 %v267
    %vm270 = vcmp.ne.s32.totalorder %v268, 0
    %vm271 = vcmp.ne.s32.totalorder %v269, 0
    %v272 = vsel %vm270, 1, 0
    %v273 = vsel %vm271, 1, 0
    %274 = vset.pattern.permute.xlu0 0
    %275 = vperm.xlu0 %274, %v272
    %v276 = vpop.permute.xlu0 %275
    %277 = vset.pattern.permute.xlu0 0
    %278 = vperm.xlu0 %277, %v273
    %v279 = vpop.permute.xlu0 %278
    %vm280 = vcmp.eq.s32.totalorder %v276, 1
    %vm281 = vcmp.eq.s32.totalorder %v279, 1
    %v282 = vsel %vm280, 0.0, %v262
    %v283 = vsel %vm281, 0.0, %v263
    %v285 = vsel %vm241, %v282, 0
    %287 = vmatprep.subr.mxu0 0.0
    %288 = vmatpush1.msra.mxu0 %v58
    %289 = vmatprep.subr.mxu0 0.0
    %290 = vmatpush1.msra.mxu0 0.0
    %291 = vmatprep.subr.mxu0 0.0
    %292 = vmatpush1.msra.mxu0 0.0
    %293 = vmatprep.subr.mxu0 0.0
    %294 = vmatpush1.msra.mxu0 0.0
    %295 = vmatprep.subr.mxu0 0.0
    %296 = vmatpush1.msra.mxu0 0.0
    %297 = vmatprep.subr.mxu0 0.0
    %298 = vmatpush1.msra.mxu0 0.0
    %299 = vmatprep.subr.mxu0 0.0
    %300 = vmatpush1.msra.mxu0 0.0
    %301 = vmatprep.subr.mxu0 0.0
    %302 = vmatpush1.msra.mxu0 0.0
    %303 = vmatprep.subr.mxu0 0.0
    %304 = vmatpush1.msra.mxu0 0.0
    %305 = vmatprep.subr.mxu0 0.0
    %306 = vmatpush1.msra.mxu0 0.0
    %307 = vmatprep.subr.mxu0 0.0
    %308 = vmatpush1.msra.mxu0 0.0
    %309 = vmatprep.subr.mxu0 0.0
    %310 = vmatpush1.msra.mxu0 0.0
    %311 = vmatprep.subr.mxu0 0.0
    %312 = vmatpush1.msra.mxu0 0.0
    %313 = vmatprep.subr.mxu0 0.0
    %314 = vmatpush1.msra.mxu0 0.0
    %315 = vmatprep.subr.mxu0 0.0
    %316 = vmatpush1.msra.mxu0 0.0
    %317 = vmatprep.subr.mxu0 0.0
    %318 = vmatpush1.msra.mxu0 0.0
    %319 = vmatprep.subr.mxu0 0.0
    %320 = vmatpush1.msra.mxu0 0.0
    %321 = vmatprep.subr.mxu0 0.0
    %322 = vmatpush1.msra.mxu0 0.0
    %323 = vmatprep.subr.mxu0 0.0
    %324 = vmatpush1.msra.mxu0 0.0
    %325 = vmatprep.subr.mxu0 0.0
    %326 = vmatpush1.msra.mxu0 0.0
    %327 = vmatprep.subr.mxu0 0.0
    %328 = vmatpush1.msra.mxu0 0.0
    %329 = vmatprep.subr.mxu0 0.0
    %330 = vmatpush1.msra.mxu0 0.0
    %331 = vmatprep.subr.mxu0 0.0
    %332 = vmatpush1.msra.mxu0 0.0
    %333 = vmatprep.subr.mxu0 0.0
    %334 = vmatpush1.msra.mxu0 0.0
    %335 = vmatprep.subr.mxu0 0.0
    %336 = vmatpush1.msra.mxu0 0.0
    %337 = vmatprep.subr.mxu0 0.0
    %338 = vmatpush1.msra.mxu0 0.0
    %339 = vmatprep.subr.mxu0 0.0
    %340 = vmatpush1.msra.mxu0 0.0
    %341 = vmatprep.subr.mxu0 0.0
    %342 = vmatpush1.msra.mxu0 0.0
    %343 = vmatprep.subr.mxu0 0.0
    %344 = vmatpush1.msra.mxu0 0.0
    %345 = vmatprep.subr.mxu0 0.0
    %346 = vmatpush1.msra.mxu0 0.0
    %347 = vmatprep.subr.mxu0 0.0
    %348 = vmatpush1.msra.mxu0 0.0
    %349 = vmatprep.subr.mxu0 0.0
    %350 = vmatpush1.msra.mxu0 0.0
    %351 = vmatprep.mubr.f32.mxu0 0.0
    %352 = vmatmul.mubr.f32.gmra.mrb[0].mxu0 %v285
    %v353 = vpop.f32.mrb[0].mxu0
    %v354 = vadd.f32 0.0, %v353
    %v355 = vpop.f32.mrb[0].mxu0
    %356 = vdwg.mxu0
    %v358 = vsel %vm241, %v283, 0
    %360 = vmatprep.subr.mxu0 0.0
    %361 = vmatpush1.msra.mxu0 %v59
    %362 = vmatprep.subr.mxu0 0.0
    %363 = vmatpush1.msra.mxu0 0.0
    %364 = vmatprep.subr.mxu0 0.0
    %365 = vmatpush1.msra.mxu0 0.0
    %366 = vmatprep.subr.mxu0 0.0
    %367 = vmatpush1.msra.mxu0 0.0
    %368 = vmatprep.subr.mxu0 0.0
    %369 = vmatpush1.msra.mxu0 0.0
    %370 = vmatprep.subr.mxu0 0.0
    %371 = vmatpush1.msra.mxu0 0.0
    %372 = vmatprep.subr.mxu0 0.0
    %373 = vmatpush1.msra.mxu0 0.0
    %374 = vmatprep.subr.mxu0 0.0
    %375 = vmatpush1.msra.mxu0 0.0
    %376 = vmatprep.subr.mxu0 0.0
    %377 = vmatpush1.msra.mxu0 0.0
    %378 = vmatprep.subr.mxu0 0.0
    %379 = vmatpush1.msra.mxu0 0.0
    %380 = vmatprep.subr.mxu0 0.0
    %381 = vmatpush1.msra.mxu0 0.0
    %382 = vmatprep.subr.mxu0 0.0
    %383 = vmatpush1.msra.mxu0 0.0
    %384 = vmatprep.subr.mxu0 0.0
    %385 = vmatpush1.msra.mxu0 0.0
    %386 = vmatprep.subr.mxu0 0.0
    %387 = vmatpush1.msra.mxu0 0.0
    %388 = vmatprep.subr.mxu0 0.0
    %389 = vmatpush1.msra.mxu0 0.0
    %390 = vmatprep.subr.mxu0 0.0
    %391 = vmatpush1.msra.mxu0 0.0
    %392 = vmatprep.subr.mxu0 0.0
    %393 = vmatpush1.msra.mxu0 0.0
    %394 = vmatprep.subr.mxu0 0.0
    %395 = vmatpush1.msra.mxu0 0.0
    %396 = vmatprep.subr.mxu0 0.0
    %397 = vmatpush1.msra.mxu0 0.0
    %398 = vmatprep.subr.mxu0 0.0
    %399 = vmatpush1.msra.mxu0 0.0
    %400 = vmatprep.subr.mxu0 0.0
    %401 = vmatpush1.msra.mxu0 0.0
    %402 = vmatprep.subr.mxu0 0.0
    %403 = vmatpush1.msra.mxu0 0.0
    %404 = vmatprep.subr.mxu0 0.0
    %405 = vmatpush1.msra.mxu0 0.0
    %406 = vmatprep.subr.mxu0 0.0
    %407 = vmatpush1.msra.mxu0 0.0
    %408 = vmatprep.subr.mxu0 0.0
    %409 = vmatpush1.msra.mxu0 0.0
    %410 = vmatprep.subr.mxu0 0.0
    %411 = vmatpush1.msra.mxu0 0.0
    %412 = vmatprep.subr.mxu0 0.0
    %413 = vmatpush1.msra.mxu0 0.0
    %414 = vmatprep.subr.mxu0 0.0
    %415 = vmatpush1.msra.mxu0 0.0
    %416 = vmatprep.subr.mxu0 0.0
    %417 = vmatpush1.msra.mxu0 0.0
    %418 = vmatprep.subr.mxu0 0.0
    %419 = vmatpush1.msra.mxu0 0.0
    %420 = vmatprep.subr.mxu0 0.0
    %421 = vmatpush1.msra.mxu0 0.0
    %422 = vmatprep.subr.mxu0 0.0
    %423 = vmatpush1.msra.mxu0 0.0
    %424 = vmatprep.mubr.f32.mxu0 0.0
    %425 = vmatmul.mubr.f32.gmra.mrb[0].mxu0 %v358
    %v426 = vpop.f32.mrb[0].mxu0
    %v427 = vadd.f32 0.0, %v426
    %v428 = vpop.f32.mrb[0].mxu0
    %429 = vdwg.mxu0
    %430 = vst.msk [vmem:[#allocation7] sm:$0xff] %vm64, %v354
    %431 = vst.msk [vmem:[#allocation7 + $0x8] sm:$0xff] %vm64, %v427
    %432 = vst.msk [vmem:[#allocation8] sm:$0xff] %vm241, %v282
    %433 = vst.msk [vmem:[#allocation8 + $0x8] sm:$0xff] %vm241, %v283
    // Predicated region
    $region30: #{tpu_custom_call.1} parent=1 // pred_check
      _
    $region31: #{tpu_custom_call.1} parent=1 // pred_check_branch
      %435 = sbr.rel (0) target = $region33
    $region32: #{tpu_custom_call.1} parent=1 // pred_region
      %s437 = ssub.s32 256, 256
      %438 = vsyncadd [#allocation4], %s437
      %s439 = sshll.u32 [#allocation7], 4
      %s440 = int_to_ptr.vmem [resolvable:$true] %s439
      %445 = dma.vmem_to_hbm [thread:$0]  %s440, 256, %s5, [#allocation4], 128, 128, 8
    $region33: #{tpu_custom_call.1} parent=1 // pred_fallthru
      _
    // Predicated region
    $region34: #{tpu_custom_call.1} parent=1 // pred_check
      _
    $region35: #{tpu_custom_call.1} parent=1 // pred_check_branch
      %447 = sbr.rel (0) target = $region37
    $region36: #{tpu_custom_call.1} parent=1 // pred_region
      %s449 = ssub.s32 256, 256
      %450 = vsyncadd [#allocation9], %s449
      %s451 = sshll.u32 [#allocation8], 4
      %s452 = int_to_ptr.vmem [resolvable:$true] %s451
      %457 = dma.vmem_to_hbm [thread:$0]  %s452, 256, %s6, [#allocation9], 128, 128, 8
    $region37: #{tpu_custom_call.1} parent=1 // pred_fallthru
      _
    // Predicated region
    $region38: #{tpu_custom_call.1} parent=1 // pred_check
      _
    $region39: #{tpu_custom_call.1} parent=1 // pred_check_branch
      %459 = sbr.rel (0) target = $region41
    $region40: #{tpu_custom_call.1} parent=1 // pred_region
      %460 = dma.done [#allocation4], 256
    $region41: #{tpu_custom_call.1} parent=1 // pred_fallthru
      _
    // Predicated region
    $region42: #{tpu_custom_call.1} parent=1 // pred_check
      _
    $region43: #{tpu_custom_call.1} parent=1 // pred_check_branch
      %462 = sbr.rel (0) target = $region45
    $region44: #{tpu_custom_call.1} parent=1 // pred_region
      %463 = dma.done [#allocation9], 256
    $region45: #{tpu_custom_call.1} parent=1 // pred_fallthru
      _
    %464 = vsyncpa [#allocation3], 1
    %465 = vsyncpa [#allocation6], 1
    %466 = vsyncpa [#allocation4], 1
    %467 = vsyncpa [#allocation9], 1

</llo_original>
